<compile_context>
chip_gen: v7x
topology: tpu7x:2x2x1
jax: 0.10.0
libtpu: 0.0.40
codegen_flags: <defaults>
</compile_context>

<pallas_src>
import jax
import jax.numpy as jnp
from jax.experimental import pallas as pl
from jax.experimental.pallas import tpu as pltpu


_LANES = 128


def _node_proj_kernel(x_ref, ws_ref, wd_ref, ps_ref, pd_ref):
    # x_ref  : (tile_n, F)  node features (native dtype; upcast here)
    # ws_ref : (1, F)       src half of the Linear weight
    # wd_ref : (1, F)       dst half of the Linear weight
    # ps_ref : (tile_n, 1)  p_src[n] = x[n] . w_src
    # pd_ref : (tile_n, 1)  p_dst[n] = x[n] . w_dst
    xv = x_ref[...].astype(jnp.float32)
    ws = ws_ref[...].astype(jnp.float32)   # broadcasts over sublanes (nodes)
    wd = wd_ref[...].astype(jnp.float32)
    ps_ref[...] = jnp.sum(xv * ws, axis=1, keepdims=True)   # lane (XLU) reduce
    pd_ref[...] = jnp.sum(xv * wd, axis=1, keepdims=True)


def _edge_score_kernel(ps_ref, pd_ref, b_ref, out_ref):
    # ps_ref, pd_ref, out_ref: (tile_r, 128) full (8,128)-tile blocks
    # b_ref: (1,) bias scalar in SMEM
    logits = ps_ref[...] + pd_ref[...] + b_ref[0]
    out_ref[...] = jax.nn.sigmoid(logits).astype(out_ref.dtype)


def score_predictor(x, src_idx, dst_idx, weight, bias):
    """x: [N, F]; src_idx/dst_idx: [E] int32; weight: [1, 2F]; bias: [1].
    Returns scores of shape [E]."""
    N, F = x.shape
    E = src_idx.shape[0]
    itemsize = jnp.dtype(x.dtype).itemsize

    # ---------------- Stage 1: per-node projections (reads x exactly once). --
    # VMEM-aware node tile: 2 pipeline buffers of (tile_n, F) must stay small.
    vmem_budget = 8 * 1024 * 1024
    rows_fit = max(8, vmem_budget // (2 * F * itemsize))
    tile_n = min(rows_fit, max(8, pl.cdiv(N, 8) * 8))
    tile_n = max(8, (tile_n // 8) * 8)
    N_pad = pl.cdiv(N, tile_n) * tile_n
    x_pad = x if N_pad == N else jnp.pad(x, ((0, N_pad - N), (0, 0)))

    # Pre-split weight in the wrapper (no per-iteration in-kernel slice).
    w_src = weight[:, :F].reshape(1, F)
    w_dst = weight[:, F:].reshape(1, F)

    ps, pd = pl.pallas_call(
        _node_proj_kernel,
        out_shape=(jax.ShapeDtypeStruct((N_pad, 1), jnp.float32),
                   jax.ShapeDtypeStruct((N_pad, 1), jnp.float32)),
        grid_spec=pltpu.PrefetchScalarGridSpec(
            num_scalar_prefetch=0,
            grid=(N_pad // tile_n,),
            in_specs=[
                pl.BlockSpec((tile_n, F), lambda i: (i, 0)),   # x tile
                pl.BlockSpec((1, F), lambda i: (0, 0)),        # w_src row
                pl.BlockSpec((1, F), lambda i: (0, 0)),        # w_dst row
            ],
            out_specs=[
                pl.BlockSpec((tile_n, 1), lambda i: (i, 0)),
                pl.BlockSpec((tile_n, 1), lambda i: (i, 0)),
            ],
        ),
        compiler_params=pltpu.CompilerParams(
            dimension_semantics=("parallel",),
            vmem_limit_bytes=32 * 1024 * 1024),
    )(x_pad, w_src, w_dst)

    # ---------------- Gather per-edge scalars (O(E) traffic). ----------------
    # TODO(synk): for very large E, fuse this gather into the edge kernel via
    # PrefetchScalarGridSpec index prefetch + in-kernel DMA instead of XLA take.
    ps_e = jnp.take(ps[:, 0], src_idx, axis=0)    # (E,)
    pd_e = jnp.take(pd[:, 0], dst_idx, axis=0)    # (E,)

    # ---------------- Stage 2: edge scores on full (8,128) tiles. ------------
    rows = pl.cdiv(E, _LANES)
    rows = pl.cdiv(rows, 8) * 8                   # multiple of 8 sublanes
    tile_r = min(rows, 512)                       # 512*128*4B = 256 KiB / buffer
    rows = pl.cdiv(rows, tile_r) * tile_r
    E_pad = rows * _LANES

    ps_2d = jnp.pad(ps_e, (0, E_pad - E)).reshape(rows, _LANES)
    pd_2d = jnp.pad(pd_e, (0, E_pad - E)).reshape(rows, _LANES)
    b_smem = bias.reshape(1).astype(jnp.float32)

    out = pl.pallas_call(
        _edge_score_kernel,
        out_shape=jax.ShapeDtypeStruct((rows, _LANES), jnp.float32),
        grid_spec=pltpu.PrefetchScalarGridSpec(
            num_scalar_prefetch=0,
            grid=(rows // tile_r,),
            in_specs=[
                pl.BlockSpec((tile_r, _LANES), lambda i: (i, 0)),
                pl.BlockSpec((tile_r, _LANES), lambda i: (i, 0)),
                pl.BlockSpec(memory_space=pltpu.MemorySpace.SMEM),  # bias
            ],
            out_specs=pl.BlockSpec((tile_r, _LANES), lambda i: (i, 0)),
        ),
        compiler_params=pltpu.CompilerParams(
            dimension_semantics=("parallel",),
            vmem_limit_bytes=32 * 1024 * 1024),
    )(ps_2d, pd_2d, b_smem)

    # Drop padded edges; torch.squeeze of [E, 1] -> [E].
    return out.reshape(E_pad)[:E]


def reference(x, src_idx, dst_idx, weight, bias):
    data = jnp.concatenate([x[src_idx], x[dst_idx]], axis=1)     # (E, 2F)
    return jax.nn.sigmoid(data @ weight.T + bias).reshape(-1)    # (E,)


if __name__ == "__main__":
    key = jax.random.PRNGKey(0)
    k_x, k_src, k_dst, k_w, k_b = jax.random.split(key, 5)

    num_nodes = 8
    in_features = 32        # F
    num_edges = 16          # E

    # Node features and the edge list of the 'nb' edge subgraph.
    x = jax.random.normal(k_x, (num_nodes, in_features), dtype=jnp.float32)
    src_idx = jax.random.randint(k_src, (num_edges,), 0, num_nodes)
    dst_idx = jax.random.randint(k_dst, (num_edges,), 0, num_nodes)

    # Deterministic Linear(in_features*2, 1) parameters (PyTorch layout).
    weight = (jax.random.normal(k_w, (1, 2 * in_features), dtype=jnp.float32)
              * (1.0 / jnp.sqrt(2.0 * in_features)))
    bias = jax.random.normal(k_b, (1,), dtype=jnp.float32) * 0.1

    scores = score_predictor(x, src_idx, dst_idx, weight, bias)
    scores = jax.block_until_ready(scores)

    ref = reference(x, src_idx, dst_idx, weight, bias)
    assert scores.shape == (num_edges,)
    assert jnp.allclose(scores, ref, atol=1e-5, rtol=1e-5)

    print("KERNEL_OK")
</pallas_src>

<mosaic_0001>
module attributes {stable_mosaic.version = 11 : i64} {
  func.func @_node_proj_kernel(%arg0: i32, %arg1: memref<8x32xf32, #tpu.memory_space<vmem>>, %arg2: memref<1x32xf32, #tpu.memory_space<vmem>>, %arg3: memref<1x32xf32, #tpu.memory_space<vmem>>, %arg4: memref<8x1xf32, #tpu.memory_space<vmem>>, %arg5: memref<8x1xf32, #tpu.memory_space<vmem>>) attributes {dimension_semantics = [#tpu.dimension_semantics<parallel>], iteration_bounds = array<i64: 1>, scalar_prefetch = 0 : i64, scratch_operands = 0 : i64, tpu.core_type = #tpu.core_type<tc>, window_params = [{transform_indices = @transform_0, window_bounds = array<i64: 8, 32>}, {pipeline_mode = #tpu.pipeline_mode<synchronous>, transform_indices = @transform_1, window_bounds = array<i64: 1, 32>}, {pipeline_mode = #tpu.pipeline_mode<synchronous>, transform_indices = @transform_2, window_bounds = array<i64: 1, 32>}, {transform_indices = @transform_3, window_bounds = array<i64: 8, 1>}, {transform_indices = @transform_4, window_bounds = array<i64: 8, 1>}]} {
    %c0 = arith.constant 0 : index
    %c0_0 = arith.constant 0 : index
    %0 = vector.load %arg1[%c0, %c0_0] : memref<8x32xf32, #tpu.memory_space<vmem>>, vector<8x32xf32>
    %c0_1 = arith.constant 0 : index
    %c0_2 = arith.constant 0 : index
    %1 = vector.load %arg2[%c0_1, %c0_2] : memref<1x32xf32, #tpu.memory_space<vmem>>, vector<1x32xf32>
    %c0_3 = arith.constant 0 : index
    %c0_4 = arith.constant 0 : index
    %2 = vector.load %arg3[%c0_3, %c0_4] : memref<1x32xf32, #tpu.memory_space<vmem>>, vector<1x32xf32>
    %3 = vector.broadcast %1 : vector<1x32xf32> to vector<8x32xf32>
    %4 = arith.mulf %0, %3 : vector<8x32xf32>
    %cst = arith.constant dense<0.000000e+00> : vector<8xf32>
    %5 = vector.multi_reduction <add>, %4, %cst [1] : vector<8x32xf32> to vector<8xf32>
    %6 = vector.shape_cast %5 : vector<8xf32> to vector<8x1xf32>
    %c0_5 = arith.constant 0 : index
    %c0_6 = arith.constant 0 : index
    %7 = vector.load %arg4[%c0_5, %c0_6] : memref<8x1xf32, #tpu.memory_space<vmem>>, vector<8x1xf32>
    tpu.vector_store %arg4[%c0_5, %c0_6], %6 {strides = array<i32>} : memref<8x1xf32, #tpu.memory_space<vmem>>, vector<8x1xf32>,
    %8 = vector.broadcast %2 : vector<1x32xf32> to vector<8x32xf32>
    %9 = arith.mulf %0, %8 : vector<8x32xf32>
    %cst_7 = arith.constant dense<0.000000e+00> : vector<8xf32>
    %10 = vector.multi_reduction <add>, %9, %cst_7 [1] : vector<8x32xf32> to vector<8xf32>
    %11 = vector.shape_cast %10 : vector<8xf32> to vector<8x1xf32>
    %c0_8 = arith.constant 0 : index
    %c0_9 = arith.constant 0 : index
    %12 = vector.load %arg5[%c0_8, %c0_9] : memref<8x1xf32, #tpu.memory_space<vmem>>, vector<8x1xf32>
    tpu.vector_store %arg5[%c0_8, %c0_9], %11 {strides = array<i32>} : memref<8x1xf32, #tpu.memory_space<vmem>>, vector<8x1xf32>,
    return
  }
  func.func @transform_0(%arg0: i32) -> (i32, i32) {
    %c0_i32 = arith.constant 0 : i32
    %c0_i32_0 = arith.constant 0 : i32
    return %arg0, %c0_i32 : i32, i32
  }
  func.func @transform_1(%arg0: i32) -> (i32, i32) {
    %c0_i32 = arith.constant 0 : i32
    %c0_i32_0 = arith.constant 0 : i32
    %c0_i32_1 = arith.constant 0 : i32
    return %c0_i32, %c0_i32_0 : i32, i32
  }
  func.func @transform_2(%arg0: i32) -> (i32, i32) {
    %c0_i32 = arith.constant 0 : i32
    %c0_i32_0 = arith.constant 0 : i32
    %c0_i32_1 = arith.constant 0 : i32
    return %c0_i32, %c0_i32_0 : i32, i32
  }
  func.func @transform_3(%arg0: i32) -> (i32, i32) {
    %c0_i32 = arith.constant 0 : i32
    %c0_i32_0 = arith.constant 0 : i32
    return %arg0, %c0_i32 : i32, i32
  }
  func.func @transform_4(%arg0: i32) -> (i32, i32) {
    %c0_i32 = arith.constant 0 : i32
    %c0_i32_0 = arith.constant 0 : i32
    return %arg0, %c0_i32 : i32, i32
  }
}

</mosaic_0001>

<llo_original>
// kernel: tpu_custom_call.1
$region0: #{tpu_custom_call.1}
  #allocation0 [shape = 'u32[]', space=smem, size = 0x4, offset = 0x4, fixed_abs, tag = 'smem constant byte address 0x4 - core index']
  #allocation1 [shape = 'u32[144,128]{1,0:T(1,128)}', space=vmem, size = 0x12000, scoped, tag = 'internal scratch']
  %s0 = inlined_call_operand.hbm [shape: f32[8,32], index: 0, kind: input, shape index: {}]
  %s1 = inlined_call_operand.vmem [shape: f32[1,32], index: 1, kind: input, shape index: {}]
  %s2 = inlined_call_operand.vmem [shape: f32[1,32], index: 2, kind: input, shape index: {}]
  %s3 = inlined_call_operand.vmem [shape: f32[8,1], index: 3, kind: output, shape index: {0}]
  %s4 = inlined_call_operand.vmem [shape: f32[8,1], index: 4, kind: output, shape index: {1}]
  %5 = xla_tuple %s3, %s4
  %s6 = sld [smem:[#allocation0]]
  $region34: #{tpu_custom_call.1} parent=0
    _
  %s8 = ssub.s32 1, %s6
  %s9 = scalar_select 0, %s8, %s6
  $region1: #{tpu_custom_call.1} parent=0
    #allocation2 [shape = 'u8[4096]{0}', space=vmem, size = 0x1000, scoped, tag = 'input window, operand 0, single buffered']
    #allocation3 [shape = 's32[1]{0}', space=sflag, size = 0x4, scoped, tag = 'scoped memory for tpu_custom_call.1']
    %10 = vsyncpa [#allocation3], 0
    // Predicated region
    $region2: #{tpu_custom_call.1} parent=1 // pred_check
      _
    $region3: #{tpu_custom_call.1} parent=1 // pred_check_branch
      %12 = sbr.rel (0) target = $region5
    $region4: #{tpu_custom_call.1} parent=1 // pred_region
      %s14 = ssub.s32 128, 128
      %15 = vsyncadd [#allocation3], %s14
      %s17 = sshll.u32 [#allocation2], 4
      %s18 = int_to_ptr.vmem [resolvable:$true] %s17
      %20 = dma.hbm_to_vmem [thread:$0]  %s0, 128, %s18, [#allocation3]
    $region5: #{tpu_custom_call.1} parent=1 // pred_fallthru
      _
    // Predicated region
    $region6: #{tpu_custom_call.1} parent=1 // pred_check
      _
    $region7: #{tpu_custom_call.1} parent=1 // pred_check_branch
      %22 = sbr.rel (0) target = $region9
    $region8: #{tpu_custom_call.1} parent=1 // pred_region
      _
    $region9: #{tpu_custom_call.1} parent=1 // pred_fallthru
      _
    // Predicated region
    $region10: #{tpu_custom_call.1} parent=1 // pred_check
      _
    $region11: #{tpu_custom_call.1} parent=1 // pred_check_branch
      %24 = sbr.rel (0) target = $region13
    $region12: #{tpu_custom_call.1} parent=1 // pred_region
      _
    $region13: #{tpu_custom_call.1} parent=1 // pred_fallthru
      _
    // Predicated region
    $region14: #{tpu_custom_call.1} parent=1 // pred_check
      _
    $region15: #{tpu_custom_call.1} parent=1 // pred_check_branch
      %26 = sbr.rel (0) target = $region17
    $region16: #{tpu_custom_call.1} parent=1 // pred_region
      %27 = dma.done [#allocation3], 128
    $region17: #{tpu_custom_call.1} parent=1 // pred_fallthru
      _
    %v28 = vld [vmem:[#allocation2] sm:$0xff]
    %v29 = vld [vmem:[%s1] sm:$0x1]
    %v30 = vld [vmem:[%s2] sm:$0x1]
    %v32 = vlaneseq
    %v33 = vshrl.u32 %v32, 7
    %v34 = vsub.s32 0, %v33
    %v35 = vrot.slane %v29, %v34
    %v37 = vmul.f32 %v28, %v35
    %vm38 = vcmask 261120
    %v39 = vsel %vm38, %v37, 0.0
    %40 = vadd.xlane.f32.xlu0 %v39
    %v41 = vpop.xlane.xlu0 %40
    %vm42 = vcmask 7168
    %43 = vst.msk [vmem:[%s3] sm:$0xff] %vm42, %v41
    %v45 = vlaneseq
    %v46 = vshrl.u32 %v45, 7
    %v47 = vsub.s32 0, %v46
    %v48 = vrot.slane %v30, %v47
    %v50 = vmul.f32 %v28, %v48
    %v51 = vsel %vm38, %v50, 0.0
    %52 = vadd.xlane.f32.xlu0 %v51
    %v53 = vpop.xlane.xlu0 %52
    %54 = vst.msk [vmem:[%s4] sm:$0xff] %vm42, %v53
    // Predicated region
    $region18: #{tpu_custom_call.1} parent=1 // pred_check
      _
    $region19: #{tpu_custom_call.1} parent=1 // pred_check_branch
      %56 = sbr.rel (0) target = $region21
    $region20: #{tpu_custom_call.1} parent=1 // pred_region
      _
    $region21: #{tpu_custom_call.1} parent=1 // pred_fallthru
      _
    // Predicated region
    $region22: #{tpu_custom_call.1} parent=1 // pred_check
      _
    $region23: #{tpu_custom_call.1} parent=1 // pred_check_branch
      %58 = sbr.rel (0) target = $region25
    $region24: #{tpu_custom_call.1} parent=1 // pred_region
      _
    $region25: #{tpu_custom_call.1} parent=1 // pred_fallthru
      _
    // Predicated region
    $region26: #{tpu_custom_call.1} parent=1 // pred_check
      _
    $region27: #{tpu_custom_call.1} parent=1 // pred_check_branch
      %60 = sbr.rel (0) target = $region29
    $region28: #{tpu_custom_call.1} parent=1 // pred_region
      _
    $region29: #{tpu_custom_call.1} parent=1 // pred_fallthru
      _
    // Predicated region
    $region30: #{tpu_custom_call.1} parent=1 // pred_check
      _
    $region31: #{tpu_custom_call.1} parent=1 // pred_check_branch
      %62 = sbr.rel (0) target = $region33
    $region32: #{tpu_custom_call.1} parent=1 // pred_region
      _
    $region33: #{tpu_custom_call.1} parent=1 // pred_fallthru
      _
    %63 = vsyncpa [#allocation3], 1

</llo_original>
